<compile_context>
chip_gen: v5e
topology: v5e:2x2
jax: 0.10.0
libtpu: 0.0.40
codegen_flags: <defaults>
</compile_context>

<pallas_src>
import functools

import jax
import jax.numpy as jnp
from jax.experimental import pallas as pl
from jax.experimental.pallas import tpu as pltpu

# view index convention (mirrors breast_cancer_classifier VIEWS.LIST)
L_CC, R_CC, L_MLO, R_MLO = 0, 1, 2, 3
N_VIEWS = 4

PS = 16                 # patch size -> contraction depth D = 256 (>= 128 lanes)
D_PATCH = PS * PS       # 256
C_FEAT = 256            # per-view feature channels (matches "256" in the module)
H_FC = 2 * C_FEAT       # 512 == 256 * 2, width of fc1_l / fc1_r

# patch rows per tile: 2048 x 256 bf16 = 1 MiB per buffer (double-buffered) plus
# a 2 MiB f32 intermediate -> amortizes the ~0.35 us per-grid-step overhead while
# staying far under v7x's 64 MiB physical / 32 MiB default scoped VMEM.
TILE_P_MAX = 2048


def _round_up(x, m):
    return ((x + m - 1) // m) * m


def _pick_tile(p, tile_p_max):
    """Largest multiple of 8 <= tile_p_max that divides P (no pad copy); else a
    padded tile whose zero rows are corrected exactly inside the kernel."""
    upper = min(tile_p_max, (p // 8) * 8)
    best = 0
    for t in range(upper, 0, -8):
        if p % t == 0:
            best = t
            break
    if best >= max(8, tile_p_max // 4):
        return best
    return min(tile_p_max, _round_up(p, 8))


# ---------------------------------------------------------------------------
# Kernel 1: per-view stand-in feature extractor + AllViewsAvgPool
# ---------------------------------------------------------------------------
def _pool_kernel(patches_ref, wconv_ref, bconv_ref, pooled8_ref, acc_ref,
                 *, n_pad, inv_p):
    # program_id only at the top level of the body (never inside pl.when bodies).
    k = pl.program_id(2)
    last_k = pl.num_programs(2) - 1

    @pl.when(k == 0)
    def _():
        if n_pad > 0:
            # Padded patch rows are exactly zero, so each contributes exactly
            # relu(bias) to the sum; pre-subtract that once instead of masking
            # every step.  n_pad/8 is exact in f32 for n_pad <= TILE_P_MAX.
            init = (-(n_pad / 8.0)) * jnp.maximum(bconv_ref[...], 0.0)   # (1, C)
            acc_ref[...] = jnp.broadcast_to(init, acc_ref.shape)
        else:
            acc_ref[...] = jnp.zeros_like(acc_ref)

    # (TP, D) bf16 @ (D, C_FEAT) bf16 -> (TP, C_FEAT) f32 on the MXU.
    feat = jnp.dot(patches_ref[...], wconv_ref[...],
                   preferred_element_type=jnp.float32)
    feat = jnp.maximum(feat + bconv_ref[...], 0.0)       # bias + ReLU in f32 (VPU)

    # Accumulate per-sublane-group partial sums: cross-vreg VALU adds only;
    # the 8 -> 1 sublane reduce is deferred to the head kernel.
    tp = feat.shape[0]
    acc_ref[...] += feat.reshape(tp // 8, 8, feat.shape[1]).sum(axis=0)

    @pl.when(k == last_k)
    def _():
        pooled8_ref[...] = acc_ref[...] * inv_p          # scaled partial sums


# ---------------------------------------------------------------------------
# Kernel 2: per-breast concat -> fc1 + ReLU -> fc2 + sigmoid -> mean over sides
# ---------------------------------------------------------------------------
def _head_kernel(pooled8_ref, w1lcc_ref, w1lmlo_ref, b1l_ref,
                 w1rcc_ref, w1rmlo_ref, b1r_ref,
                 w2l_ref, b2l_ref, w2r_ref, b2r_ref, out_ref):
    def pooled(v):
        # final 8 -> 1 reduce of the per-view partial sums (already 1/P scaled)
        return jnp.sum(pooled8_ref[v], axis=1).astype(jnp.bfloat16)   # (N, C)

    # torch.cat([CC, MLO], dim=1) @ W1  ==  CC @ W1_top + MLO @ W1_bot  (no concat)
    h_l = (jnp.dot(pooled(L_CC), w1lcc_ref[...], preferred_element_type=jnp.float32)
           + jnp.dot(pooled(L_MLO), w1lmlo_ref[...], preferred_element_type=jnp.float32)
           + b1l_ref[...])
    h_r = (jnp.dot(pooled(R_CC), w1rcc_ref[...], preferred_element_type=jnp.float32)
           + jnp.dot(pooled(R_MLO), w1rmlo_ref[...], preferred_element_type=jnp.float32)
           + b1r_ref[...])
    h_l = jnp.maximum(h_l, 0.0)
    h_r = jnp.maximum(h_r, 0.0)

    # fc2 (512 -> 1): VPU multiply + lane reduce (no 1-lane-wide MXU matmul).
    y_l = jax.nn.sigmoid(jnp.sum(h_l * w2l_ref[...], axis=-1, keepdims=True)
                         + b2l_ref[...])
    y_r = jax.nn.sigmoid(jnp.sum(h_r * w2r_ref[...], axis=-1, keepdims=True)
                         + b2r_ref[...])
    y = 0.5 * (y_l + y_r)                                  # (N, 1)
    out_ref[...] = jnp.broadcast_to(y, out_ref.shape)      # lane-dense (N, 128)


# ---------------------------------------------------------------------------
# Wrapper
# ---------------------------------------------------------------------------
def _patchify(x):
    """(N, 4, H, W) -> (4, N, P, PS*PS) non-overlapping patches (pure JAX glue)."""
    N, V, H, W = x.shape
    assert V == N_VIEWS
    assert H % PS == 0 and W % PS == 0, "spatial dims must be divisible by PS"
    Hp, Wp = H // PS, W // PS
    p = x.reshape(N, V, Hp, PS, Wp, PS)
    p = p.transpose(1, 0, 2, 4, 3, 5)            # (V, N, Hp, Wp, PS, PS)
    p = p.reshape(V, N, Hp * Wp, PS * PS)        # (V, N, P, D)
    return p, Hp * Wp


def breast_wise_risk_forward(x, params, *, tile_p_max=TILE_P_MAX):
    N = x.shape[0]
    # bf16 BEFORE the patchify transpose: halves the bytes the rearrangement moves.
    patches, P = _patchify(x.astype(jnp.bfloat16))

    tp = _pick_tile(P, tile_p_max)               # sublane-aligned patch tile
    p_pad = _round_up(P, tp)
    n_pad = p_pad - P
    if n_pad:                                    # rare; corrected in-kernel
        patches = jnp.pad(patches, ((0, 0), (0, 0), (0, n_pad), (0, 0)))
    n_k = p_pad // tp

    wconv_bf = params["wconv"].astype(jnp.bfloat16)

    pool_kernel = functools.partial(_pool_kernel, n_pad=n_pad, inv_p=1.0 / P)

    pooled8 = pl.pallas_call(
        pool_kernel,
        out_shape=jax.ShapeDtypeStruct((N_VIEWS, N, 8, C_FEAT), jnp.float32),
        grid=(N_VIEWS, N, n_k),
        in_specs=[
            # patch tiles stream (pipelined) along the innermost grid axis
            pl.BlockSpec((None, None, tp, D_PATCH), lambda v, n, k: (v, n, k, 0)),
            # per-view weights / bias stay resident across (n, k)
            pl.BlockSpec((None, D_PATCH, C_FEAT), lambda v, n, k: (v, 0, 0)),
            pl.BlockSpec((None, 1, C_FEAT), lambda v, n, k: (v, 0, 0)),
        ],
        out_specs=pl.BlockSpec((None, None, 8, C_FEAT),
                               lambda v, n, k: (v, n, 0, 0)),
        scratch_shapes=[pltpu.VMEM((8, C_FEAT), jnp.float32)],
        compiler_params=pltpu.CompilerParams(
            dimension_semantics=("parallel", "parallel", "arbitrary")),
    )(patches, wconv_bf, params["bconv"])

    # bf16 fc1 weights, split so the per-breast concat becomes two MXU dots
    w1l = params["w1l_t"].astype(jnp.bfloat16)
    w1r = params["w1r_t"].astype(jnp.bfloat16)

    def full(shape):
        zeros = (0,) * len(shape)
        return pl.BlockSpec(shape, lambda i, _z=zeros: _z)

    out = pl.pallas_call(
        _head_kernel,
        out_shape=jax.ShapeDtypeStruct((N, 128), jnp.float32),
        grid=(1,),
        in_specs=[
            full((N_VIEWS, N, 8, C_FEAT)),                          # pooled sums
            full((C_FEAT, H_FC)), full((C_FEAT, H_FC)), full((1, H_FC)),  # fc1_l
            full((C_FEAT, H_FC)), full((C_FEAT, H_FC)), full((1, H_FC)),  # fc1_r
            full((1, H_FC)), full((1, 1)),                          # fc2_l
            full((1, H_FC)), full((1, 1)),                          # fc2_r
        ],
        out_specs=full((N, 128)),
        compiler_params=pltpu.CompilerParams(dimension_semantics=("arbitrary",)),
    )(pooled8, w1l[:C_FEAT], w1l[C_FEAT:], params["b1l"],
      w1r[:C_FEAT], w1r[C_FEAT:], params["b1r"],
      params["w2l"], params["b2l"], params["w2r"], params["b2r"])

    return out[:, 0]                                      # (N,), matches .mean(1)


# ---------------------------------------------------------------------------
# Parameters + pure-JAX reference
# ---------------------------------------------------------------------------
def init_params(key):
    """Deterministic synthetic parameters (PyTorch-Linear-style uniform init)."""
    ks = jax.random.split(key, 10)

    def uni(k, shape, fan_in):
        bound = 1.0 / (fan_in ** 0.5)
        return jax.random.uniform(k, shape, jnp.float32, minval=-bound, maxval=bound)

    return dict(
        wconv=uni(ks[0], (N_VIEWS, D_PATCH, C_FEAT), D_PATCH),
        bconv=uni(ks[1], (N_VIEWS, 1, C_FEAT), D_PATCH),
        # fc1 weights stored pre-transposed to (in, out) relative to nn.Linear
        w1l_t=uni(ks[2], (H_FC, H_FC), H_FC),
        b1l=uni(ks[3], (1, H_FC), H_FC),
        w1r_t=uni(ks[4], (H_FC, H_FC), H_FC),
        b1r=uni(ks[5], (1, H_FC), H_FC),
        # fc2 weights stored as (1, in) rows of nn.Linear(512, 1)
        w2l=uni(ks[6], (1, H_FC), H_FC),
        b2l=uni(ks[7], (1, 1), H_FC),
        w2r=uni(ks[8], (1, H_FC), H_FC),
        b2r=uni(ks[9], (1, 1), H_FC),
    )


def reference_forward(x, params):
    """Pure-JAX reference of the same math (bf16 matmul operands, f32 accum)."""
    N = x.shape[0]
    patches, P = _patchify(x.astype(jnp.bfloat16))
    w_bf = params["wconv"].astype(jnp.bfloat16)
    pooled = []
    for v in range(N_VIEWS):
        feat = jnp.dot(patches[v].reshape(N * P, D_PATCH), w_bf[v],
                       preferred_element_type=jnp.float32) + params["bconv"][v]
        feat = jnp.maximum(feat, 0.0)
        pooled.append(feat.reshape(N, P, C_FEAT).mean(axis=1).astype(jnp.bfloat16))

    def fc1(cc, mlo, w_t, b):
        w = w_t.astype(jnp.bfloat16)
        h = (jnp.dot(cc, w[:C_FEAT], preferred_element_type=jnp.float32)
             + jnp.dot(mlo, w[C_FEAT:], preferred_element_type=jnp.float32) + b)
        return jnp.maximum(h, 0.0)

    h_l = fc1(pooled[L_CC], pooled[L_MLO], params["w1l_t"], params["b1l"])
    h_r = fc1(pooled[R_CC], pooled[R_MLO], params["w1r_t"], params["b1r"])
    y_l = jax.nn.sigmoid(jnp.sum(h_l * params["w2l"], axis=-1) + params["b2l"][:, 0])
    y_r = jax.nn.sigmoid(jnp.sum(h_r * params["w2r"], axis=-1) + params["b2r"][:, 0])
    return 0.5 * (y_l + y_r)


if __name__ == "__main__":
    key = jax.random.PRNGKey(0)
    kx, kp = jax.random.split(key)

    # small shapes: batch=2, 4 single-channel views, 16x16 spatial
    x = jax.random.normal(kx, (2, N_VIEWS, 16, 16), dtype=jnp.float32)
    params = init_params(kp)

    y = jax.block_until_ready(breast_wise_risk_forward(x, params))
    y_ref = reference_forward(x, params)

    assert y.shape == (2,)
    assert jnp.allclose(y, y_ref, atol=2e-3, rtol=2e-3), (y, y_ref)

    print("KERNEL_OK")
</pallas_src>

<mosaic_0001>
module attributes {stable_mosaic.version = 11 : i64} {
  func.func @_pool_kernel(%arg0: i32, %arg1: i32, %arg2: i32, %arg3: memref<1x1x8x256xbf16, #tpu.memory_space<vmem>>, %arg4: memref<1x256x256xbf16, #tpu.memory_space<vmem>>, %arg5: memref<1x1x256xf32, #tpu.memory_space<vmem>>, %arg6: memref<1x1x8x256xf32, #tpu.memory_space<vmem>>, %arg7: memref<8x256xf32, #tpu.memory_space<vmem>>) attributes {dimension_semantics = [#tpu.dimension_semantics<parallel>, #tpu.dimension_semantics<parallel>, #tpu.dimension_semantics<arbitrary>], iteration_bounds = array<i64: 4, 2, 1>, scalar_prefetch = 0 : i64, scratch_operands = 1 : i64, tpu.core_type = #tpu.core_type<tc>, window_params = [{transform_indices = @transform_0, window_bounds = array<i64: 1, 1, 8, 256>}, {transform_indices = @transform_1, window_bounds = array<i64: 1, 256, 256>}, {transform_indices = @transform_2, window_bounds = array<i64: 1, 1, 256>}, {transform_indices = @transform_3, window_bounds = array<i64: 1, 1, 8, 256>}]} {
    %c0_i32 = arith.constant 0 : i32
    %0 = arith.cmpi eq, %arg2, %c0_i32 : i32
    %1 = arith.extui %0 : i1 to i32
    %c0_i32_0 = arith.constant 0 : i32
    %2 = arith.cmpi ne, %1, %c0_i32_0 : i32
    scf.if %2 {
      %c0_18 = arith.constant 0 : index
      %c0_19 = arith.constant 0 : index
      %c0_20 = arith.constant 0 : index
      %22 = vector.load %arg5[%c0_18, %c0_19, %c0_20] : memref<1x1x256xf32, #tpu.memory_space<vmem>>, vector<1x1x256xf32>
      %23 = vector.shape_cast %22 : vector<1x1x256xf32> to vector<1x256xf32>
      %cst_21 = arith.constant 0.000000e+00 : f32
      %24 = vector.broadcast %cst_21 : f32 to vector<1x256xf32>
      %25 = arith.maximumf %23, %24 : vector<1x256xf32>
      %cst_22 = arith.constant -8.750000e-01 : f32
      %26 = vector.broadcast %cst_22 : f32 to vector<1x256xf32>
      %27 = arith.mulf %26, %25 : vector<1x256xf32>
      %28 = vector.shape_cast %27 : vector<1x256xf32> to vector<1x256xf32>
      %29 = vector.broadcast %28 : vector<1x256xf32> to vector<8x256xf32>
      %c0_23 = arith.constant 0 : index
      %c0_24 = arith.constant 0 : index
      %30 = vector.load %arg7[%c0_23, %c0_24] : memref<8x256xf32, #tpu.memory_space<vmem>>, vector<8x256xf32>
      tpu.vector_store %arg7[%c0_23, %c0_24], %29 {strides = array<i32>} : memref<8x256xf32, #tpu.memory_space<vmem>>, vector<8x256xf32>,
    } else {
    }
    %c0 = arith.constant 0 : index
    %c0_1 = arith.constant 0 : index
    %c0_2 = arith.constant 0 : index
    %c0_3 = arith.constant 0 : index
    %3 = vector.load %arg3[%c0, %c0_1, %c0_2, %c0_3] : memref<1x1x8x256xbf16, #tpu.memory_space<vmem>>, vector<1x1x8x256xbf16>
    %4 = vector.shape_cast %3 : vector<1x1x8x256xbf16> to vector<8x256xbf16>
    %c0_4 = arith.constant 0 : index
    %c0_5 = arith.constant 0 : index
    %c0_6 = arith.constant 0 : index
    %5 = vector.load %arg4[%c0_4, %c0_5, %c0_6] : memref<1x256x256xbf16, #tpu.memory_space<vmem>>, vector<1x256x256xbf16>
    %6 = vector.shape_cast %5 : vector<1x256x256xbf16> to vector<256x256xbf16>
    %cst = arith.constant dense<0.000000e+00> : vector<8x256xf32>
    %7 = tpu.matmul %4, %6, %cst {dimension_numbers = #tpu.dot_dimension_numbers<[1], [0], [0], [1], [0, 0, 1, 1], [], []>} : vector<8x256xbf16>, vector<256x256xbf16>, vector<8x256xf32> -> vector<8x256xf32>
    %c0_7 = arith.constant 0 : index
    %c0_8 = arith.constant 0 : index
    %c0_9 = arith.constant 0 : index
    %8 = vector.load %arg5[%c0_7, %c0_8, %c0_9] : memref<1x1x256xf32, #tpu.memory_space<vmem>>, vector<1x1x256xf32>
    %9 = vector.shape_cast %8 : vector<1x1x256xf32> to vector<1x256xf32>
    %10 = vector.broadcast %9 : vector<1x256xf32> to vector<8x256xf32>
    %11 = arith.addf %7, %10 : vector<8x256xf32>
    %cst_10 = arith.constant 0.000000e+00 : f32
    %12 = vector.broadcast %cst_10 : f32 to vector<8x256xf32>
    %13 = arith.maximumf %11, %12 : vector<8x256xf32>
    %c0_11 = arith.constant 0 : index
    %c0_12 = arith.constant 0 : index
    %14 = vector.load %arg7[%c0_11, %c0_12] : memref<8x256xf32, #tpu.memory_space<vmem>>, vector<8x256xf32>
    %15 = vector.shape_cast %13 : vector<8x256xf32> to vector<1x8x256xf32>
    %cst_13 = arith.constant dense<0.000000e+00> : vector<8x256xf32>
    %16 = vector.multi_reduction <add>, %15, %cst_13 [0] : vector<1x8x256xf32> to vector<8x256xf32>
    %17 = arith.addf %14, %16 : vector<8x256xf32>
    %c0_14 = arith.constant 0 : index
    %c0_15 = arith.constant 0 : index
    %18 = vector.load %arg7[%c0_14, %c0_15] : memref<8x256xf32, #tpu.memory_space<vmem>>, vector<8x256xf32>
    tpu.vector_store %arg7[%c0_14, %c0_15], %17 {strides = array<i32>} : memref<8x256xf32, #tpu.memory_space<vmem>>, vector<8x256xf32>,
    %c0_i32_16 = arith.constant 0 : i32
    %19 = arith.cmpi eq, %arg2, %c0_i32_16 : i32
    %20 = arith.extui %19 : i1 to i32
    %c0_i32_17 = arith.constant 0 : i32
    %21 = arith.cmpi ne, %20, %c0_i32_17 : i32
    scf.if %21 {
      %c0_18 = arith.constant 0 : index
      %c0_19 = arith.constant 0 : index
      %22 = vector.load %arg7[%c0_18, %c0_19] : memref<8x256xf32, #tpu.memory_space<vmem>>, vector<8x256xf32>
      %cst_20 = arith.constant 1.000000e+00 : f32
      %23 = vector.broadcast %cst_20 : f32 to vector<8x256xf32>
      %24 = arith.mulf %22, %23 : vector<8x256xf32>
      %c0_21 = arith.constant 0 : index
      %c0_22 = arith.constant 0 : index
      %c0_23 = arith.constant 0 : index
      %c0_24 = arith.constant 0 : index
      %25 = vector.load %arg6[%c0_21, %c0_22, %c0_23, %c0_24] : memref<1x1x8x256xf32, #tpu.memory_space<vmem>>, vector<1x1x8x256xf32>
      %26 = vector.shape_cast %25 : vector<1x1x8x256xf32> to vector<8x256xf32>
      %27 = vector.shape_cast %24 : vector<8x256xf32> to vector<1x1x8x256xf32>
      tpu.vector_store %arg6[%c0_21, %c0_22, %c0_23, %c0_24], %27 {strides = array<i32>} : memref<1x1x8x256xf32, #tpu.memory_space<vmem>>, vector<1x1x8x256xf32>,
    } else {
    }
    return
  }
  func.func @transform_0(%arg0: i32, %arg1: i32, %arg2: i32) -> (i32, i32, i32, i32) {
    %c0_i32 = arith.constant 0 : i32
    %c0_i32_0 = arith.constant 0 : i32
    return %arg0, %arg1, %arg2, %c0_i32 : i32, i32, i32, i32
  }
  func.func @transform_1(%arg0: i32, %arg1: i32, %arg2: i32) -> (i32, i32, i32) {
    %c0_i32 = arith.constant 0 : i32
    %c0_i32_0 = arith.constant 0 : i32
    %c0_i32_1 = arith.constant 0 : i32
    return %arg0, %c0_i32, %c0_i32_0 : i32, i32, i32
  }
  func.func @transform_2(%arg0: i32, %arg1: i32, %arg2: i32) -> (i32, i32, i32) {
    %c0_i32 = arith.constant 0 : i32
    %c0_i32_0 = arith.constant 0 : i32
    %c0_i32_1 = arith.constant 0 : i32
    return %arg0, %c0_i32, %c0_i32_0 : i32, i32, i32
  }
  func.func @transform_3(%arg0: i32, %arg1: i32, %arg2: i32) -> (i32, i32, i32, i32) {
    %c0_i32 = arith.constant 0 : i32
    %c0_i32_0 = arith.constant 0 : i32
    %c0_i32_1 = arith.constant 0 : i32
    return %arg0, %arg1, %c0_i32, %c0_i32_0 : i32, i32, i32, i32
  }
}

</mosaic_0001>

<llo_original>
// kernel: tpu_custom_call.1
$region0: #{tpu_custom_call.1}
  #allocation0 [shape = 'u32[]', space=smem, size = 0x4, offset = 0x4, fixed_abs, tag = 'smem constant byte address 0x4 - core index']
  #allocation1 [shape = 'u32[72,128]{1,0:T(1,128)}', space=vmem, size = 0x9000, scoped, tag = 'internal scratch']
  #allocation2 [shape = 'f32[8,256]{1,0:T(8,128)}', space=vmem, size = 0x2000, scoped, tag = 'scratch operand']
  %s0 = inlined_call_operand.hbm [shape: bf16[4,2,8,256], index: 0, kind: input, shape index: {}]
  %s1 = inlined_call_operand.hbm [shape: bf16[4,256,256], index: 1, kind: input, shape index: {}]
  %s2 = inlined_call_operand.hbm [shape: f32[4,1,256], index: 2, kind: input, shape index: {}]
  %s3 = inlined_call_operand.hbm [shape: f32[4,2,8,256], index: 3, kind: output, shape index: {}]
  %s4 = sld [smem:[#allocation0]]
  $region65: #{tpu_custom_call.1} parent=0
    _
  %s6 = ssub.s32 1, %s4
  %s7 = scalar_select 0, %s6, %s4
  $region1: #{tpu_custom_call.1} parent=0
    #allocation3 [shape = 'u8[8192]{0}', space=vmem, size = 0x2000, scoped, tag = 'input window, operand 0']
    #allocation4 [shape = 's32[2]{0}', space=sflag, size = 0x8, scoped, tag = 'scoped memory for tpu_custom_call.1']
    #allocation5 [shape = 's32[2]{0}', space=sflag, size = 0x8, scoped, tag = 'scoped memory for tpu_custom_call.1']
    #allocation6 [shape = 'u8[262144]{0}', space=vmem, size = 0x40000, scoped, tag = 'input window, operand 1']
    #allocation7 [shape = 's32[2]{0}', space=sflag, size = 0x8, scoped, tag = 'scoped memory for tpu_custom_call.1']
    #allocation8 [shape = 'u8[2048]{0}', space=vmem, size = 0x800, scoped, tag = 'input window, operand 2']
    #allocation9 [shape = 'u8[16384]{0}', space=vmem, size = 0x4000, scoped, tag = 'output window, operand 0']
    %8 = vsyncpa [#allocation4], 0
    %s9 = scalar_lea.sflag [#allocation4], 1
    %10 = vsyncpa %s9, 0
    %11 = vsyncpa [#allocation7], 0
    %s12 = scalar_lea.sflag [#allocation7], 1
    %13 = vsyncpa %s12, 0
    %14 = vsyncpa [#allocation5], 0
    %s15 = scalar_lea.sflag [#allocation5], 1
    %16 = vsyncpa %s15, 0
    loop: start=0, step=1, limit=10
    $region2: #{tpu_custom_call.1} parent=1 // loop_pre_header
      _
    $region3: #{tpu_custom_call.1} parent=1 // loop_header
      %s18 = sphi 0, %s22
      %p19 = scmp.ge.s32.totalorder %s18, 10
      %s25 = sphi 0, %s44
      %s26 = sphi 0, %s40
      %s27 = sphi 0, %s36
      %s28 = sphi 0, %s25
      %s29 = sphi 0, %s26
      %s30 = sphi 0, %s27
      %s31 = sphi 0, %s28
      %s32 = sphi 0, %s29
      %s33 = sphi 0, %s30
      %s51 = sphi 0, %s53
      %s54 = sphi 0, %s51
      %s55 = sphi 0, %s54
      %s71 = sphi 0, %s55
      %s77 = sphi 0, %s79
      %s80 = sphi 0, %s77
      %s81 = sphi 0, %s80
      %s97 = sphi 0, %s81
      %s103 = sphi 0, %s105
      %s106 = sphi 0, %s103
      %s107 = sphi 0, %s106
      %s123 = sphi 0, %s107
      %s131 = sphi 0, %s133
      %s134 = sphi 0, %s131
      %s135 = sphi 0, %s134
      %s151 = sphi 0, %s135
    $region4: #{tpu_custom_call.1} parent=1 // loop_header_branch
      %21 = sbr.rel (%p19) target = $region8
    $region5: #{tpu_custom_call.1} parent=1 // loop_body
      %s23 = ssub.s32 %s18, 1
      %s24 = ssub.s32 %s18, 2
      %s34 = sadd.s32 1, %s27
      %p35 = scmp.ge.s32.totalorder %s34, 1
      %s36 = scalar_select %p35, 0, %s34
      %s37 = sadd.s32 1, %s26
      %s38 = scalar_select %p35, %s37, %s26
      %p39 = scmp.ge.s32.totalorder %s38, 2
      %s40 = scalar_select %p39, 0, %s38
      %s41 = sadd.s32 1, %s25
      %s42 = scalar_select %p39, %s41, %s25
      %p43 = scmp.ge.s32.totalorder %s42, 4
      %s44 = scalar_select %p43, 0, %s42
      %s45 = ssub.s32 %s25, %s44
      %s46 = ssub.s32 %s26, %s40
      %s47 = sor.u32 %s45, %s46
      %s48 = ssub.s32 %s27, %s36
      %s49 = sor.u32 %s47, %s48
      %p50 = scmp.eq.s32.totalorder %s49, 0
      %s52 = sadd.s32 %s51, 1
      %s53 = scalar_select %p50, %s51, %s52
      %p56 = pneg %p50
      %p57 = scmp.eq.s32.totalorder %s18, 7
      %p58 = por %p56, %p57
      %p59 = scmp.ne.s32.totalorder %s51, %s54
      %p60 = scmp.eq.s32.totalorder %s18, 0
      %p61 = por %p59, %p60
      %p62 = scmp.ne.s32.totalorder %s51, %s54
      %p63 = scmp.eq.s32.totalorder %s23, 7
      %p64 = por %p62, %p63
      %p65 = scmp.ne.s32.totalorder %s54, %s55
      %p66 = scmp.eq.s32.totalorder %s23, 0
      %p67 = por %p65, %p66
      %p68 = scmp.ne.s32.totalorder %s54, %s55
      %p69 = scmp.eq.s32.totalorder %s24, 7
      %p70 = por %p68, %p69
      %p72 = scmp.ne.s32.totalorder %s55, %s71
      %p73 = scmp.eq.s32.totalorder %s24, 0
      %p74 = por %p72, %p73
      %s75 = ssub.s32 %s25, %s44
      %p76 = scmp.eq.s32.totalorder %s75, 0
      %s78 = sadd.s32 %s77, 1
      %s79 = scalar_select %p76, %s77, %s78
      %p82 = pneg %p76
      %p83 = scmp.eq.s32.totalorder %s18, 7
      %p84 = por %p82, %p83
      %p85 = scmp.ne.s32.totalorder %s77, %s80
      %p86 = scmp.eq.s32.totalorder %s18, 0
      %p87 = por %p85, %p86
      %p88 = scmp.ne.s32.totalorder %s77, %s80
      %p89 = scmp.eq.s32.totalorder %s23, 7
      %p90 = por %p88, %p89
      %p91 = scmp.ne.s32.totalorder %s80, %s81
      %p92 = scmp.eq.s32.totalorder %s23, 0
      %p93 = por %p91, %p92
      %p94 = scmp.ne.s32.totalorder %s80, %s81
      %p95 = scmp.eq.s32.totalorder %s24, 7
      %p96 = por %p94, %p95
      %p98 = scmp.ne.s32.totalorder %s81, %s97
      %p99 = scmp.eq.s32.totalorder %s24, 0
      %p100 = por %p98, %p99
      %s101 = ssub.s32 %s25, %s44
      %p102 = scmp.eq.s32.totalorder %s101, 0
      %s104 = sadd.s32 %s103, 1
      %s105 = scalar_select %p102, %s103, %s104
      %p108 = pneg %p102
      %p109 = scmp.eq.s32.totalorder %s18, 7
      %p110 = por %p108, %p109
      %p111 = scmp.ne.s32.totalorder %s103, %s106
      %p112 = scmp.eq.s32.totalorder %s18, 0
      %p113 = por %p111, %p112
      %p114 = scmp.ne.s32.totalorder %s103, %s106
      %p115 = scmp.eq.s32.totalorder %s23, 7
      %p116 = por %p114, %p115
      %p117 = scmp.ne.s32.totalorder %s106, %s107
      %p118 = scmp.eq.s32.totalorder %s23, 0
      %p119 = por %p117, %p118
      %p120 = scmp.ne.s32.totalorder %s106, %s107
      %p121 = scmp.eq.s32.totalorder %s24, 7
      %p122 = por %p120, %p121
      %p124 = scmp.ne.s32.totalorder %s107, %s123
      %p125 = scmp.eq.s32.totalorder %s24, 0
      %p126 = por %p124, %p125
      %s127 = ssub.s32 %s25, %s44
      %s128 = ssub.s32 %s26, %s40
      %s129 = sor.u32 %s127, %s128
      %p130 = scmp.eq.s32.totalorder %s129, 0
      %s132 = sadd.s32 %s131, 1
      %s133 = scalar_select %p130, %s131, %s132
      %p136 = pneg %p130
      %p137 = scmp.eq.s32.totalorder %s18, 7
      %p138 = por %p136, %p137
      %p139 = scmp.ne.s32.totalorder %s131, %s134
      %p140 = scmp.eq.s32.totalorder %s18, 0
      %p141 = por %p139, %p140
      %p142 = scmp.ne.s32.totalorder %s131, %s134
      %p143 = scmp.eq.s32.totalorder %s23, 7
      %p144 = por %p142, %p143
      %p145 = scmp.ne.s32.totalorder %s134, %s135
      %p146 = scmp.eq.s32.totalorder %s23, 0
      %p147 = por %p145, %p146
      %p148 = scmp.ne.s32.totalorder %s134, %s135
      %p149 = scmp.eq.s32.totalorder %s24, 7
      %p150 = por %p148, %p149
      %p152 = scmp.ne.s32.totalorder %s135, %s151
      %p153 = scmp.eq.s32.totalorder %s24, 0
      %p154 = por %p152, %p153
      %p155 = scmp.le.s32.totalorder 1, %s18
      %p156 = scmp.lt.s32.totalorder %s18, 9
      %p157 = pnand %p155, %p156
      %p158 = pneg %p157
      // Predicated region
      $region9: #{tpu_custom_call.1} parent=5 // pred_check
        _
      $region10: #{tpu_custom_call.1} parent=5 // pred_check_branch
        %160 = sbr.rel (%p157) target = $region12
      $region11: #{tpu_custom_call.1} parent=5 // pred_region
        %s161 = ssub.s32 %s18, 1
      $region12: #{tpu_custom_call.1} parent=5 // pred_fallthru
        _
      %p162 = scmp.lt.s32.totalorder %s18, 8
      // Predicated region
      $region13: #{tpu_custom_call.1} parent=5 // pred_check
        %p163 = pneg %p162
      $region14: #{tpu_custom_call.1} parent=5 // pred_check_branch
        %165 = sbr.rel (%p163) target = $region16
      $region15: #{tpu_custom_call.1} parent=5 // pred_region
        // Predicated region
        $region17: #{tpu_custom_call.1} parent=15 // pred_check
          %p166 = pneg %p61
        $region18: #{tpu_custom_call.1} parent=15 // pred_check_branch
          %168 = sbr.rel (%p166) target = $region20
        $region19: #{tpu_custom_call.1} parent=15 // pred_region
          %s169 = sand.u32 %s51, 1
          %s170 = scalar_lea.sflag [#allocation4], %s169
          %s171 = sand.u32 %s51, 1
          %s172 = smul.addr %s171, 8
          %s173 = scalar_lea.vmem [#allocation3], %s172
          %175 = vsyncadd %s170, 0
          %s176 = smul.addr %s27, 2
          %s177 = smul.addr %s26, 2
          %s178 = sadd.s32 %s176, %s177
          %s179 = smul.addr %s25, 4
          %s180 = sadd.s32 %s178, %s179
          %s181 = smul.addr %s180, 4
          %s182 = scalar_lea.hbm %s0, %s181
          %s184 = sshll.u32 %s182, 4
          %s185 = int_to_ptr.hbm [resolvable:$true] %s184
          %s186 = sshll.u32 %s173, 4
          %s187 = int_to_ptr.vmem [resolvable:$true] %s186
          %189 = dma.hbm_to_vmem [thread:$0]  %s185, 128, %s187, %s170
        $region20: #{tpu_custom_call.1} parent=15 // pred_fallthru
          _
        // Predicated region
        $region21: #{tpu_custom_call.1} parent=15 // pred_check
          %p190 = pneg %p87
        $region22: #{tpu_custom_call.1} parent=15 // pred_check_branch
          %192 = sbr.rel (%p190) target = $region24
        $region23: #{tpu_custom_call.1} parent=15 // pred_region
          %s193 = sand.u32 %s18, 1
          %s194 = scalar_lea.sflag [#allocation7], %s193
          %s195 = sand.u32 %s77, 1
          %s196 = smul.addr %s195, 256
          %s197 = scalar_lea.vmem [#allocation6], %s196
          %199 = vsyncadd %s194, 0
          %s200 = smul.addr %s25, 64
          %s201 = smul.addr %s200, 4
          %s202 = scalar_lea.hbm %s1, %s201
          %s203 = sshll.u32 %s202, 4
          %s204 = int_to_ptr.hbm [resolvable:$true] %s203
          %s205 = sshll.u32 %s197, 4
          %s206 = int_to_ptr.vmem [resolvable:$true] %s205
          %211 = dma.hbm_to_vmem [thread:$0]  %s204, 4096, %s206, %s194, 128, 128, 8
        $region24: #{tpu_custom_call.1} parent=15 // pred_fallthru
          _
        // Predicated region
        $region25: #{tpu_custom_call.1} parent=15 // pred_check
          %p212 = pneg %p113
        $region26: #{tpu_custom_call.1} parent=15 // pred_check_branch
          %214 = sbr.rel (%p212) target = $region28
        $region27: #{tpu_custom_call.1} parent=15 // pred_region
          %s215 = sand.u32 %s18, 1
          %s216 = scalar_lea.sflag [#allocation7], %s215
          %s217 = sand.u32 %s103, 1
          %s218 = smul.addr %s217, 2
          %s219 = scalar_lea.vmem [#allocation8], %s218
          %221 = vsyncadd %s216, 0
          %s222 = smul.addr %s25, 2
          %s223 = scalar_lea.hbm %s2, %s222
          %s225 = sshll.u32 %s223, 4
          %s226 = int_to_ptr.hbm [resolvable:$true] %s225
          %s227 = sshll.u32 %s219, 4
          %s228 = int_to_ptr.vmem [resolvable:$true] %s227
          %230 = dma.hbm_to_vmem [thread:$0]  %s226, 32, %s228, %s216
        $region28: #{tpu_custom_call.1} parent=15 // pred_fallthru
          _
      $region16: #{tpu_custom_call.1} parent=5 // pred_fallthru
        _
      %p231 = scmp.le.s32.totalorder 1, %s18
      %p232 = scmp.lt.s32.totalorder %s18, 9
      %p233 = pnand %p231, %p232
      %p234 = pneg %p233
      // Predicated region
      $region29: #{tpu_custom_call.1} parent=5 // pred_check
        _
      $region30: #{tpu_custom_call.1} parent=5 // pred_check_branch
        %236 = sbr.rel (%p233) target = $region32
      $region31: #{tpu_custom_call.1} parent=5 // pred_region
        %s237 = ssub.s32 %s18, 1
        %s238 = sand.u32 %s54, 1
        %s239 = scalar_lea.sflag [#allocation4], %s238
        %s240 = sand.u32 %s54, 1
        %s241 = smul.addr %s240, 8
        %s242 = scalar_lea.vmem [#allocation3], %s241
        // Predicated region
        $region33: #{tpu_custom_call.1} parent=31 // pred_check
          %p243 = pneg %p67
        $region34: #{tpu_custom_call.1} parent=31 // pred_check_branch
          %245 = sbr.rel (%p243) target = $region36
        $region35: #{tpu_custom_call.1} parent=31 // pred_region
          %247 = dma.done %s239, 128
        $region36: #{tpu_custom_call.1} parent=31 // pred_fallthru
          _
        %s248 = sand.u32 %s23, 1
        %s249 = scalar_lea.sflag [#allocation7], %s248
        %s250 = sand.u32 %s80, 1
        %s251 = smul.addr %s250, 256
        %s252 = scalar_lea.vmem [#allocation6], %s251
        // Predicated region
        $region37: #{tpu_custom_call.1} parent=31 // pred_check
          %p253 = pneg %p93
        $region38: #{tpu_custom_call.1} parent=31 // pred_check_branch
          %255 = sbr.rel (%p253) target = $region40
        $region39: #{tpu_custom_call.1} parent=31 // pred_region
          %257 = dma.done %s249, 4096
        $region40: #{tpu_custom_call.1} parent=31 // pred_fallthru
          _
        %s258 = sand.u32 %s23, 1
        %s259 = scalar_lea.sflag [#allocation7], %s258
        %s260 = sand.u32 %s106, 1
        %s261 = smul.addr %s260, 2
        %s262 = scalar_lea.vmem [#allocation8], %s261
        // Predicated region
        $region41: #{tpu_custom_call.1} parent=31 // pred_check
          %p263 = pneg %p119
        $region42: #{tpu_custom_call.1} parent=31 // pred_check_branch
          %265 = sbr.rel (%p263) target = $region44
        $region43: #{tpu_custom_call.1} parent=31 // pred_region
          %267 = dma.done %s259, 32
        $region44: #{tpu_custom_call.1} parent=31 // pred_fallthru
          _
        %s268 = sand.u32 %s54, 1
        %s269 = scalar_lea.sflag [#allocation4], %s268
        %s270 = sand.u32 %s54, 1
        %s271 = smul.addr %s270, 8
        %s272 = scalar_lea.vmem [#allocation3], %s271
        %p273 = pneg %p67
        %p274 = pneg %p64
        %s275 = sand.u32 %s23, 1
        %s276 = scalar_lea.sflag [#allocation7], %s275
        %s277 = sand.u32 %s80, 1
        %s278 = smul.addr %s277, 256
        %s279 = scalar_lea.vmem [#allocation6], %s278
        %p280 = pneg %p93
        %p281 = pneg %p90
        %s282 = sand.u32 %s23, 1
        %s283 = scalar_lea.sflag [#allocation7], %s282
        %s284 = sand.u32 %s106, 1
        %s285 = smul.addr %s284, 2
        %s286 = scalar_lea.vmem [#allocation8], %s285
        %p287 = pneg %p119
        %p288 = pneg %p116
        %p289 = pneg %p147
        %p290 = pneg %p144
        %s291 = sand.u32 %s134, 1
        %s292 = scalar_lea.sflag [#allocation5], %s291
        %s293 = sand.u32 %s134, 1
        %s294 = smul.addr %s293, 16
        %s295 = scalar_lea.vmem [#allocation9], %s294
        %p296 = scmp.eq.s32.totalorder %s30, 0
        // Predicated region
        $region45: #{tpu_custom_call.1} parent=31 // pred_check
          %p297 = pneg %p296
        $region46: #{tpu_custom_call.1} parent=31 // pred_check_branch
          %299 = sbr.rel (%p297) target = $region48
        $region47: #{tpu_custom_call.1} parent=31 // pred_region
          %v300 = vld [vmem:[%s262] sm:$0x3]
          %v301 = vmax.f32 %v300, 0.0
          %v302 = vmul.f32 %v301, -0.875
          %v304 = vperm.slane %v302, 0
          %v305 = vperm.slane %v302, 1
          %308 = vst [vmem:[#allocation2] sm:$0xff] %v304
          %309 = vst [vmem:[#allocation2 + $0x8] sm:$0xff] %v305
        $region48: #{tpu_custom_call.1} parent=31 // pred_fallthru
          _
        %v310 = vld [vmem:[%s242] sm:$0xff]
        %v311 = vld [vmem:[%s252] sm:$0xff]
        %v312 = vld [vmem:[%s252 + $0x8] sm:$0xff]
        %v313 = vld [vmem:[%s252 + $0x10] sm:$0xff]
        %v314 = vld [vmem:[%s252 + $0x18] sm:$0xff]
        %v315 = vld [vmem:[%s252 + $0x20] sm:$0xff]
        %v316 = vld [vmem:[%s252 + $0x28] sm:$0xff]
        %v317 = vld [vmem:[%s252 + $0x30] sm:$0xff]
        %v318 = vld [vmem:[%s252 + $0x38] sm:$0xff]
        %v319 = vld [vmem:[%s252 + $0x40] sm:$0xff]
        %v320 = vld [vmem:[%s252 + $0x48] sm:$0xff]
        %v321 = vld [vmem:[%s252 + $0x50] sm:$0xff]
        %v322 = vld [vmem:[%s252 + $0x58] sm:$0xff]
        %v323 = vld [vmem:[%s252 + $0x60] sm:$0xff]
        %v324 = vld [vmem:[%s252 + $0x68] sm:$0xff]
        %v325 = vld [vmem:[%s252 + $0x70] sm:$0xff]
        %v326 = vld [vmem:[%s252 + $0x78] sm:$0xff]
        %v327 = vld [vmem:[%s252 + $0x80] sm:$0xff]
        %v328 = vld [vmem:[%s252 + $0x88] sm:$0xff]
        %v329 = vld [vmem:[%s252 + $0x90] sm:$0xff]
        %v330 = vld [vmem:[%s252 + $0x98] sm:$0xff]
        %v331 = vld [vmem:[%s252 + $0xa0] sm:$0xff]
        %v332 = vld [vmem:[%s252 + $0xa8] sm:$0xff]
        %v333 = vld [vmem:[%s252 + $0xb0] sm:$0xff]
        %v334 = vld [vmem:[%s252 + $0xb8] sm:$0xff]
        %v335 = vld [vmem:[%s252 + $0xc0] sm:$0xff]
        %v336 = vld [vmem:[%s252 + $0xc8] sm:$0xff]
        %v337 = vld [vmem:[%s252 + $0xd0] sm:$0xff]
        %v338 = vld [vmem:[%s252 + $0xd8] sm:$0xff]
        %v339 = vld [vmem:[%s252 + $0xe0] sm:$0xff]
        %v340 = vld [vmem:[%s252 + $0xe8] sm:$0xff]
        %v341 = vld [vmem:[%s252 + $0xf0] sm:$0xff]
        %v342 = vld [vmem:[%s252 + $0xf8] sm:$0xff]
        %v343 = vld [vmem:[%s262] sm:$0x3]
        %v345 = vperm.slane %v343, 0
        %v346 = vperm.slane %v343, 1
        %v350 = vunpack.c.l.b16 %v310
        %v351 = vunpack.c.h.b16 %v310
        %v352 = vpack.c.b16 %v350, %v350
        %v353 = vpack.c.b16 %v351, %v351
        %v388 = vunpack.c.l.b16 %v311
        %v389 = vunpack.c.h.b16 %v311
        %v390 = vunpack.c.l.b16 %v312
        %v391 = vunpack.c.h.b16 %v312
        %v392 = vunpack.c.l.b16 %v313
        %v393 = vunpack.c.h.b16 %v313
        %v394 = vunpack.c.l.b16 %v314
        %v395 = vunpack.c.h.b16 %v314
        %v396 = vunpack.c.l.b16 %v315
        %v397 = vunpack.c.h.b16 %v315
        %v398 = vunpack.c.l.b16 %v316
        %v399 = vunpack.c.h.b16 %v316
        %v400 = vunpack.c.l.b16 %v317
        %v401 = vunpack.c.h.b16 %v317
        %v402 = vunpack.c.l.b16 %v318
        %v403 = vunpack.c.h.b16 %v318
        %v404 = vunpack.c.l.b16 %v319
        %v405 = vunpack.c.h.b16 %v319
        %v406 = vunpack.c.l.b16 %v320
        %v407 = vunpack.c.h.b16 %v320
        %v408 = vunpack.c.l.b16 %v321
        %v409 = vunpack.c.h.b16 %v321
        %v410 = vunpack.c.l.b16 %v322
        %v411 = vunpack.c.h.b16 %v322
        %v412 = vunpack.c.l.b16 %v323
        %v413 = vunpack.c.h.b16 %v323
        %v414 = vunpack.c.l.b16 %v324
        %v415 = vunpack.c.h.b16 %v324
        %v416 = vunpack.c.l.b16 %v325
        %v417 = vunpack.c.h.b16 %v325
        %v418 = vunpack.c.l.b16 %v326
        %v419 = vunpack.c.h.b16 %v326
        %v420 = vunpack.c.l.b16 %v327
        %v421 = vunpack.c.h.b16 %v327
        %v422 = vunpack.c.l.b16 %v328
        %v423 = vunpack.c.h.b16 %v328
        %v424 = vunpack.c.l.b16 %v329
        %v425 = vunpack.c.h.b16 %v329
        %v426 = vunpack.c.l.b16 %v330
        %v427 = vunpack.c.h.b16 %v330
        %v428 = vunpack.c.l.b16 %v331
        %v429 = vunpack.c.h.b16 %v331
        %v430 = vunpack.c.l.b16 %v332
        %v431 = vunpack.c.h.b16 %v332
        %v432 = vunpack.c.l.b16 %v333
        %v433 = vunpack.c.h.b16 %v333
        %v434 = vunpack.c.l.b16 %v334
        %v435 = vunpack.c.h.b16 %v334
        %v436 = vunpack.c.l.b16 %v335
        %v437 = vunpack.c.h.b16 %v335
        %v438 = vunpack.c.l.b16 %v336
        %v439 = vunpack.c.h.b16 %v336
        %v440 = vunpack.c.l.b16 %v337
        %v441 = vunpack.c.h.b16 %v337
        %v442 = vunpack.c.l.b16 %v338
        %v443 = vunpack.c.h.b16 %v338
        %v444 = vunpack.c.l.b16 %v339
        %v445 = vunpack.c.h.b16 %v339
        %v446 = vunpack.c.l.b16 %v340
        %v447 = vunpack.c.h.b16 %v340
        %v448 = vunpack.c.l.b16 %v341
        %v449 = vunpack.c.h.b16 %v341
        %v450 = vunpack.c.l.b16 %v342
        %v451 = vunpack.c.h.b16 %v342
        %v452 = vpack.c.b16 %v390, %v388
        %v453 = vpack.c.b16 %v391, %v389
        %v454 = vpack.c.b16 %v394, %v392
        %v455 = vpack.c.b16 %v395, %v393
        %v456 = vpack.c.b16 %v398, %v396
        %v457 = vpack.c.b16 %v399, %v397
        %v458 = vpack.c.b16 %v402, %v400
        %v459 = vpack.c.b16 %v403, %v401
        %v460 = vpack.c.b16 %v406, %v404
        %v461 = vpack.c.b16 %v407, %v405
        %v462 = vpack.c.b16 %v410, %v408
        %v463 = vpack.c.b16 %v411, %v409
        %v464 = vpack.c.b16 %v414, %v412
        %v465 = vpack.c.b16 %v415, %v413
        %v466 = vpack.c.b16 %v418, %v416
        %v467 = vpack.c.b16 %v419, %v417
        %v468 = vpack.c.b16 %v422, %v420
        %v469 = vpack.c.b16 %v423, %v421
        %v470 = vpack.c.b16 %v426, %v424
        %v471 = vpack.c.b16 %v427, %v425
        %v472 = vpack.c.b16 %v430, %v428
        %v473 = vpack.c.b16 %v431, %v429
        %v474 = vpack.c.b16 %v434, %v432
        %v475 = vpack.c.b16 %v435, %v433
        %v476 = vpack.c.b16 %v438, %v436
        %v477 = vpack.c.b16 %v439, %v437
        %v478 = vpack.c.b16 %v442, %v440
        %v479 = vpack.c.b16 %v443, %v441
        %v480 = vpack.c.b16 %v446, %v444
        %v481 = vpack.c.b16 %v447, %v445
        %v482 = vpack.c.b16 %v450, %v448
        %v483 = vpack.c.b16 %v451, %v449
        %516 = vmatpush.bf16.msra.mxu0 %v466
        %517 = vmatpush.bf16.msra.mxu0 %v464
        %518 = vmatpush.bf16.msra.mxu0 %v462
        %519 = vmatpush.bf16.msra.mxu0 %v460
        %520 = vmatpush.bf16.msra.mxu0 %v458
        %521 = vmatpush.bf16.msra.mxu0 %v456
        %522 = vmatpush.bf16.msra.mxu0 %v454
        %523 = vmatpush.bf16.msra.mxu0 %v452
        %524 = vmatmul.bf16.gmra.mxu0 %v352
        %v525 = vpop.f32.mrf.mxu0
        %v526 = vadd.f32 %v345, %v525
        %v527 = vpop.f32.mrf.mxu0
        %528 = vdwg.mxu0
        %529 = vmatpush.bf16.msra.mxu0 %v482
        %530 = vmatpush.bf16.msra.mxu0 %v480
        %531 = vmatpush.bf16.msra.mxu0 %v478
        %532 = vmatpush.bf16.msra.mxu0 %v476
        %533 = vmatpush.bf16.msra.mxu0 %v474
        %534 = vmatpush.bf16.msra.mxu0 %v472
        %535 = vmatpush.bf16.msra.mxu0 %v470
        %536 = vmatpush.bf16.msra.mxu0 %v468
        %537 = vmatmul.bf16.gmra.mxu0 %v353
        %v538 = vpop.f32.mrf.mxu0
        %v539 = vadd.f32 %v526, %v538
        %v540 = vpop.f32.mrf.mxu0
        %541 = vdwg.mxu0
        %542 = vmatpush.bf16.msra.mxu0 %v467
        %543 = vmatpush.bf16.msra.mxu0 %v465
        %544 = vmatpush.bf16.msra.mxu0 %v463
        %545 = vmatpush.bf16.msra.mxu0 %v461
        %546 = vmatpush.bf16.msra.mxu0 %v459
        %547 = vmatpush.bf16.msra.mxu0 %v457
        %548 = vmatpush.bf16.msra.mxu0 %v455
        %549 = vmatpush.bf16.msra.mxu0 %v453
        %550 = vmatmul.bf16.gmra.mxu0 %v352
        %v551 = vpop.f32.mrf.mxu0
        %v552 = vadd.f32 %v346, %v551
        %v553 = vpop.f32.mrf.mxu0
        %554 = vdwg.mxu0
        %555 = vmatpush.bf16.msra.mxu0 %v483
        %556 = vmatpush.bf16.msra.mxu0 %v481
        %557 = vmatpush.bf16.msra.mxu0 %v479
        %558 = vmatpush.bf16.msra.mxu0 %v477
        %559 = vmatpush.bf16.msra.mxu0 %v475
        %560 = vmatpush.bf16.msra.mxu0 %v473
        %561 = vmatpush.bf16.msra.mxu0 %v471
        %562 = vmatpush.bf16.msra.mxu0 %v469
        %563 = vmatmul.bf16.gmra.mxu0 %v353
        %v564 = vpop.f32.mrf.mxu0
        %v565 = vadd.f32 %v552, %v564
        %v566 = vpop.f32.mrf.mxu0
        %567 = vdwg.mxu0
        %v568 = vmax.f32 %v539, 0.0
        %v569 = vmax.f32 %v565, 0.0
        %v570 = vld [vmem:[#allocation2] sm:$0xff]
        %v571 = vld [vmem:[#allocation2 + $0x8] sm:$0xff]
        %v572 = vadd.f32 %v568, 0.0
        %v573 = vadd.f32 %v569, 0.0
        %v574 = vadd.f32 %v570, %v572
        %v575 = vadd.f32 %v571, %v573
        %576 = vst [vmem:[#allocation2] sm:$0xff] %v574
        %577 = vst [vmem:[#allocation2 + $0x8] sm:$0xff] %v575
        // Predicated region
        $region49: #{tpu_custom_call.1} parent=31 // pred_check
          %p578 = pneg %p296
        $region50: #{tpu_custom_call.1} parent=31 // pred_check_branch
          %580 = sbr.rel (%p578) target = $region52
        $region51: #{tpu_custom_call.1} parent=31 // pred_region
          %v581 = vld [vmem:[#allocation2] sm:$0xff]
          %v582 = vld [vmem:[#allocation2 + $0x8] sm:$0xff]
          %583 = vst [vmem:[%s295] sm:$0xff] %v581
          %584 = vst [vmem:[%s295 + $0x8] sm:$0xff] %v582
        $region52: #{tpu_custom_call.1} parent=31 // pred_fallthru
          _
        %s585 = sand.u32 %s134, 1
        %s586 = scalar_lea.sflag [#allocation5], %s585
        %s587 = sand.u32 %s134, 1
        %s588 = smul.addr %s587, 16
        %s589 = scalar_lea.vmem [#allocation9], %s588
        // Predicated region
        $region53: #{tpu_custom_call.1} parent=31 // pred_check
          %p590 = pneg %p144
        $region54: #{tpu_custom_call.1} parent=31 // pred_check_branch
          %592 = sbr.rel (%p590) target = $region56
        $region55: #{tpu_custom_call.1} parent=31 // pred_region
          %594 = vsyncadd %s586, 0
          %s595 = smul.addr %s29, 2
          %s596 = smul.addr %s28, 4
          %s597 = sadd.s32 %s595, %s596
          %s598 = smul.addr %s597, 8
          %s599 = scalar_lea.hbm %s3, %s598
          %s601 = sshll.u32 %s589, 4
          %s602 = int_to_ptr.vmem [resolvable:$true] %s601
          %s603 = sshll.u32 %s599, 4
          %s604 = int_to_ptr.hbm [resolvable:$true] %s603
          %606 = dma.vmem_to_hbm [thread:$0]  %s602, 256, %s604, %s586
        $region56: #{tpu_custom_call.1} parent=31 // pred_fallthru
          _
      $region32: #{tpu_custom_call.1} parent=5 // pred_fallthru
        _
      %p607 = scmp.le.s32.totalorder 2, %s18
      // Predicated region
      $region57: #{tpu_custom_call.1} parent=5 // pred_check
        %p608 = pneg %p607
      $region58: #{tpu_custom_call.1} parent=5 // pred_check_branch
        %610 = sbr.rel (%p608) target = $region60
      $region59: #{tpu_custom_call.1} parent=5 // pred_region
        %s611 = ssub.s32 %s18, 2
        // Predicated region
        $region61: #{tpu_custom_call.1} parent=59 // pred_check
          %p612 = pneg %p150
        $region62: #{tpu_custom_call.1} parent=59 // pred_check_branch
          %614 = sbr.rel (%p612) target = $region64
        $region63: #{tpu_custom_call.1} parent=59 // pred_region
          %s615 = sand.u32 %s135, 1
          %s616 = scalar_lea.sflag [#allocation5], %s615
          %s617 = sand.u32 %s135, 1
          %s618 = smul.addr %s617, 16
          %s619 = scalar_lea.vmem [#allocation9], %s618
          %621 = dma.done %s616, 256
        $region64: #{tpu_custom_call.1} parent=59 // pred_fallthru
          _
      $region60: #{tpu_custom_call.1} parent=5 // pred_fallthru
        _
    $region6: #{tpu_custom_call.1} parent=1 // loop_footer
      %s22 = sadd.s32 1, %s18
    $region7: #{tpu_custom_call.1} parent=1 // loop_footer_branch
      %17 = sbr.rel target = $region3
    $region8: #{tpu_custom_call.1} parent=1 // loop_exit
      _
    %622 = vsyncpa [#allocation4], 1
    %s623 = scalar_lea.sflag [#allocation4], 1
    %624 = vsyncpa %s623, 1
    %625 = vsyncpa [#allocation7], 1
    %s626 = scalar_lea.sflag [#allocation7], 1
    %627 = vsyncpa %s626, 1
    %628 = vsyncpa [#allocation5], 1
    %s629 = scalar_lea.sflag [#allocation5], 1
    %630 = vsyncpa %s629, 1

</llo_original>
